<compile_context>
chip_gen: v6e
topology: v6e:2x2x1
jax: 0.10.0
libtpu: 0.0.40
codegen_flags: <defaults>
</compile_context>

<pallas_src>
import functools

import jax
import jax.numpy as jnp
from jax.experimental import pallas as pl
from jax.experimental.pallas import tpu as pltpu

_LANE = 128
_SUBLANE = 8


# --------------------------------------------------------------------------
# Kernels
# --------------------------------------------------------------------------
def _readout_single_kernel(x_ref, w_ref, o_ref, *, inv_n):
    # x_ref : (tb, Nf, laneH)  full (folded) node slab for tb batch elements
    # w_ref : (laneH, H_out)   pre-transposed (and lane-fold-tiled) weight
    # o_ref : (tb, H_out)
    pooled = jnp.sum(x_ref[...], axis=1, dtype=jnp.float32) * inv_n
    y = jnp.dot(pooled.astype(w_ref.dtype), w_ref[...],
                preferred_element_type=jnp.float32)
    o_ref[...] = y.astype(o_ref.dtype)


def _readout_reduce_kernel(x_ref, w_ref, o_ref, acc_ref, *, inv_n):
    # x_ref : (tb, tn, laneH) node tile; acc_ref: (tb, laneH) f32 running sum
    n_step = pl.program_id(1)

    @pl.when(n_step == 0)
    def _init():
        acc_ref[...] = jnp.zeros_like(acc_ref)

    acc_ref[...] += jnp.sum(x_ref[...], axis=1, dtype=jnp.float32)

    @pl.when(n_step == pl.num_programs(1) - 1)
    def _finalize():
        pooled = acc_ref[...] * inv_n
        y = jnp.dot(pooled.astype(w_ref.dtype), w_ref[...],
                    preferred_element_type=jnp.float32)
        o_ref[...] = y.astype(o_ref.dtype)


# --------------------------------------------------------------------------
# Tile / budget helpers
# --------------------------------------------------------------------------
def _vmem_budget_bytes():
    """~75% of physical VMEM (v5e/v6e: 128 MiB -> 96 MiB, v7x: 64 MiB -> 48 MiB)."""
    phys = 128 << 20
    try:
        phys = int(pltpu.get_tpu_info().vmem_capacity_bytes)
    except Exception:
        pass
    return max(16 << 20, int(phys * 0.75))


def _batch_tile(B, want):
    """tb == B (full extent) or a multiple of 8 dividing B; -1 => caller pads B."""
    want = max(1, min(want, B))
    if B <= want:
        return B
    for t in range((want // _SUBLANE) * _SUBLANE, 0, -_SUBLANE):
        if B % t == 0:
            return t
    return -1


def _ensure_two_tiles(B, tb):
    """Prefer >= 2 batch tiles (lets the two v7x TCs split the batch axis)."""
    if B // tb >= 2 or B < 2 * _SUBLANE:
        return tb
    t2 = _batch_tile(B, B // 2)
    return t2 if t2 > 0 else tb


def _lane_fold(H):
    """Fold g node rows into one 128-lane row when H < 128 and H | 128."""
    if H < _LANE and _LANE % H == 0:
        return _LANE // H
    return 1


# --------------------------------------------------------------------------
# Wrapper
# --------------------------------------------------------------------------
def readout_forward(x, w, *, pooling="mean", block_b=128, block_n=1024):
    """ReadOut forward: pooling(Linear(x)) pooled over the node axis.

    x: (B, N, H) -- batch, nodes, hidden.
    w: (H, H)   PyTorch nn.Linear weight, (out_features, in_features) layout.
    pooling: "mean" (default) or "sum".  Pool-first is exact only for linear
             poolings and a bias-free Linear.
    Returns (B, H).
    """
    if pooling not in ("mean", "sum"):
        # TODO(synk): arbitrary user-supplied pooling callables (e.g. max) have no
        # generic pool-first Pallas rewrite; only linear mean/sum are implemented.
        raise NotImplementedError(f"unsupported pooling: {pooling!r}")

    B, N, H = x.shape
    H_out, H_in = w.shape
    assert H_in == H, "weight must be (n_hidden, n_hidden) in PyTorch layout"
    inv_n = (1.0 / N) if pooling == "mean" else 1.0

    # ---- lane folding: make the streamed last dim a full 128-lane row --------
    g = _lane_fold(H)
    if g > 1:
        n_pad = (-N) % g
        if n_pad:  # zero node rows: the node-sum is unchanged, 1/N uses real N
            x = jnp.pad(x, ((0, 0), (0, n_pad), (0, 0)))
        nf = (N + n_pad) // g
        x = x.reshape(B, nf, g * H)
    else:
        nf = N
    lane_h = g * H

    # One-time XLA transpose (and g-fold tiling) of W: (g*H_in, H_out).
    # The in-kernel contraction is then a plain ((1,),(0,)) matmul, and the
    # lane-fold reduction is absorbed into the MXU contraction for free.
    w_mat = jnp.transpose(w)
    if g > 1:
        w_mat = jnp.tile(w_mat, (g, 1))

    bx = x.dtype.itemsize
    bw = w_mat.dtype.itemsize
    bo = x.dtype.itemsize
    budget = _vmem_budget_bytes()

    # ---- batch tile (second-to-last dim of the (tb, H_out) output block) -----
    tb = _batch_tile(B, block_b)
    padded_b = B
    if tb < 0:  # no aligned divisor: zero-pad the batch, slice the output later
        tb = ((min(block_b, B) + _SUBLANE - 1) // _SUBLANE) * _SUBLANE
        padded_b = ((B + tb - 1) // tb) * tb
        x = jnp.pad(x, ((0, padded_b - B), (0, 0), (0, 0)))
    tb = _ensure_two_tiles(padded_b, tb)
    grid_b = padded_b // tb

    # ---- VMEM budget: 2x x-block + 2x W + 2x out (+ acc on the reduce path) --
    fixed = 2 * lane_h * H_out * bw + 2 * tb * H_out * bo
    full_slab = 2 * tb * nf * lane_h * bx

    if fixed + full_slab <= budget:
        # ----- single pass: full node slab per batch tile, no accumulator -----
        kernel = functools.partial(_readout_single_kernel, inv_n=inv_n)
        out = pl.pallas_call(
            kernel,
            out_shape=jax.ShapeDtypeStruct((padded_b, H_out), x.dtype),
            grid_spec=pltpu.PrefetchScalarGridSpec(
                num_scalar_prefetch=0,
                grid=(grid_b,),
                in_specs=[
                    pl.BlockSpec((tb, nf, lane_h), lambda b: (b, 0, 0)),
                    pl.BlockSpec((lane_h, H_out), lambda b: (0, 0)),
                ],
                out_specs=pl.BlockSpec((tb, H_out), lambda b: (b, 0)),
            ),
            compiler_params=pltpu.CompilerParams(
                dimension_semantics=("parallel",),
                vmem_limit_bytes=budget),
        )(x, w_mat)
    else:
        # ----- node-tiled streaming reduction (reduction axis last) -----------
        acc_bytes = tb * lane_h * 4
        avail = budget - fixed - acc_bytes
        tn = avail // (2 * tb * lane_h * bx)
        tn = min(tn, nf, block_n)
        tn = max(_SUBLANE, (tn // _SUBLANE) * _SUBLANE)
        n_pad2 = (-nf) % tn
        if n_pad2:  # zero node rows: sum unchanged
            x = jnp.pad(x, ((0, 0), (0, n_pad2), (0, 0)))
        nf_p = nf + n_pad2

        kernel = functools.partial(_readout_reduce_kernel, inv_n=inv_n)
        out = pl.pallas_call(
            kernel,
            out_shape=jax.ShapeDtypeStruct((padded_b, H_out), x.dtype),
            grid_spec=pltpu.PrefetchScalarGridSpec(
                num_scalar_prefetch=0,
                grid=(grid_b, nf_p // tn),
                in_specs=[
                    pl.BlockSpec((tb, tn, lane_h), lambda b, n: (b, n, 0)),
                    pl.BlockSpec((lane_h, H_out), lambda b, n: (0, 0)),
                ],
                out_specs=pl.BlockSpec((tb, H_out), lambda b, n: (b, 0)),
                scratch_shapes=[pltpu.VMEM((tb, lane_h), jnp.float32)],
            ),
            compiler_params=pltpu.CompilerParams(
                dimension_semantics=("parallel", "arbitrary"),
                vmem_limit_bytes=budget),
        )(x, w_mat)

    if padded_b != B:
        out = out[:B]
    return out  # (B, H_out)


# --------------------------------------------------------------------------
# Self-test
# --------------------------------------------------------------------------
if __name__ == "__main__":
    key = jax.random.PRNGKey(0)

    # Small shapes implied by the module: batch=2, nodes=8, n_hidden=32.
    B, N, H = 2, 8, 32
    kx, kw, k2 = jax.random.split(key, 3)
    x = jax.random.normal(kx, (B, N, H), dtype=jnp.float32)
    bound = 1.0 / (H ** 0.5)   # PyTorch default Linear init range
    w = jax.random.uniform(kw, (H, H), dtype=jnp.float32,
                           minval=-bound, maxval=bound)

    out = readout_forward(x, w)           # exercises the H<128 lane-fold path
    jax.block_until_ready(out)

    ref = jnp.mean(
        jnp.einsum("bnh,oh->bno", x, w, precision=jax.lax.Precision.HIGHEST),
        axis=1)
    assert out.shape == (B, H)
    # Tolerance covers MXU f32 rounding / different summation order.
    assert jnp.allclose(out, ref, atol=1e-4, rtol=1e-4)

    # Second tiny check: H = 128 (no lane folding).
    H2 = 128
    kx2, kw2 = jax.random.split(k2)
    x2 = jax.random.normal(kx2, (B, N, H2), dtype=jnp.float32)
    b2 = 1.0 / (H2 ** 0.5)
    w2 = jax.random.uniform(kw2, (H2, H2), dtype=jnp.float32,
                            minval=-b2, maxval=b2)
    out2 = readout_forward(x2, w2)
    jax.block_until_ready(out2)
    ref2 = jnp.mean(
        jnp.einsum("bnh,oh->bno", x2, w2, precision=jax.lax.Precision.HIGHEST),
        axis=1)
    assert jnp.allclose(out2, ref2, atol=1e-4, rtol=1e-4)

    print("KERNEL_OK")
</pallas_src>

<mosaic_0001>
module attributes {stable_mosaic.version = 11 : i64} {
  func.func @_readout_single_kernel(%arg0: i32, %arg1: memref<2x2x128xf32, #tpu.memory_space<vmem>>, %arg2: memref<128x32xf32, #tpu.memory_space<vmem>>, %arg3: memref<2x32xf32, #tpu.memory_space<vmem>>) attributes {dimension_semantics = [#tpu.dimension_semantics<parallel>], iteration_bounds = array<i64: 1>, scalar_prefetch = 0 : i64, scratch_operands = 0 : i64, tpu.core_type = #tpu.core_type<tc>, window_params = [{transform_indices = @transform_0, window_bounds = array<i64: 2, 2, 128>}, {pipeline_mode = #tpu.pipeline_mode<synchronous>, transform_indices = @transform_1, window_bounds = array<i64: 128, 32>}, {transform_indices = @transform_2, window_bounds = array<i64: 2, 32>}]} {
    %c0 = arith.constant 0 : index
    %c0_0 = arith.constant 0 : index
    %c0_1 = arith.constant 0 : index
    %0 = vector.load %arg1[%c0, %c0_0, %c0_1] : memref<2x2x128xf32, #tpu.memory_space<vmem>>, vector<2x2x128xf32>
    %cst = arith.constant dense<0.000000e+00> : vector<2x128xf32>
    %1 = vector.multi_reduction <add>, %0, %cst [1] : vector<2x2x128xf32> to vector<2x128xf32>
    %cst_2 = arith.constant 1.250000e-01 : f32
    %2 = vector.broadcast %cst_2 : f32 to vector<2x128xf32>
    %3 = arith.mulf %1, %2 : vector<2x128xf32>
    %c0_3 = arith.constant 0 : index
    %c0_4 = arith.constant 0 : index
    %4 = vector.load %arg2[%c0_3, %c0_4] : memref<128x32xf32, #tpu.memory_space<vmem>>, vector<128x32xf32>
    %cst_5 = arith.constant dense<0.000000e+00> : vector<2x32xf32>
    %5 = tpu.matmul %3, %4, %cst_5 {dimension_numbers = #tpu.dot_dimension_numbers<[1], [0], [0], [1], [0, 0, 1, 1], [], []>} : vector<2x128xf32>, vector<128x32xf32>, vector<2x32xf32> -> vector<2x32xf32>
    %c0_6 = arith.constant 0 : index
    %c0_7 = arith.constant 0 : index
    %6 = vector.load %arg3[%c0_6, %c0_7] : memref<2x32xf32, #tpu.memory_space<vmem>>, vector<2x32xf32>
    tpu.vector_store %arg3[%c0_6, %c0_7], %5 {strides = array<i32>} : memref<2x32xf32, #tpu.memory_space<vmem>>, vector<2x32xf32>,
    return
  }
  func.func @transform_0(%arg0: i32) -> (i32, i32, i32) {
    %c0_i32 = arith.constant 0 : i32
    %c0_i32_0 = arith.constant 0 : i32
    %c0_i32_1 = arith.constant 0 : i32
    return %arg0, %c0_i32, %c0_i32_0 : i32, i32, i32
  }
  func.func @transform_1(%arg0: i32) -> (i32, i32) {
    %c0_i32 = arith.constant 0 : i32
    %c0_i32_0 = arith.constant 0 : i32
    %c0_i32_1 = arith.constant 0 : i32
    return %c0_i32, %c0_i32_0 : i32, i32
  }
  func.func @transform_2(%arg0: i32) -> (i32, i32) {
    %c0_i32 = arith.constant 0 : i32
    %c0_i32_0 = arith.constant 0 : i32
    return %arg0, %c0_i32 : i32, i32
  }
}

</mosaic_0001>

<llo_original>
// kernel: tpu_custom_call.1
$region0: #{tpu_custom_call.1}
  #allocation0 [shape = 'u32[]', space=smem, size = 0x4, offset = 0x4, fixed_abs, tag = 'smem constant byte address 0x4 - core index']
  #allocation1 [shape = 'u32[144,128]{1,0:T(1,128)}', space=vmem, size = 0x12000, scoped, tag = 'internal scratch']
  %s0 = inlined_call_operand.vmem [shape: f32[2,2,128], index: 0, kind: input, shape index: {}]
  %s1 = inlined_call_operand.vmem [shape: f32[128,32], index: 1, kind: input, shape index: {}]
  %s2 = inlined_call_operand.hbm [shape: f32[2,32], index: 2, kind: output, shape index: {}]
  %s3 = sld [smem:[#allocation0]]
  $region18: #{tpu_custom_call.1} parent=0
    _
  %s5 = ssub.s32 1, %s3
  %s6 = scalar_select 0, %s5, %s3
  $region1: #{tpu_custom_call.1} parent=0
    #allocation2 [shape = 'u8[1024]{0}', space=vmem, size = 0x400, scoped, tag = 'output window, operand 0, single buffered']
    #allocation3 [shape = 's32[1]{0}', space=sflag, size = 0x4, scoped, tag = 'scoped memory for tpu_custom_call.1']
    %7 = vsyncpa [#allocation3], 0
    // Predicated region
    $region2: #{tpu_custom_call.1} parent=1 // pred_check
      _
    $region3: #{tpu_custom_call.1} parent=1 // pred_check_branch
      %9 = sbr.rel (0) target = $region5
    $region4: #{tpu_custom_call.1} parent=1 // pred_region
      _
    $region5: #{tpu_custom_call.1} parent=1 // pred_fallthru
      _
    // Predicated region
    $region6: #{tpu_custom_call.1} parent=1 // pred_check
      _
    $region7: #{tpu_custom_call.1} parent=1 // pred_check_branch
      %11 = sbr.rel (0) target = $region9
    $region8: #{tpu_custom_call.1} parent=1 // pred_region
      _
    $region9: #{tpu_custom_call.1} parent=1 // pred_fallthru
      _
    %v12 = vld [vmem:[%s0] sm:$0x3]
    %v13 = vld [vmem:[%s0 + $0x2] sm:$0x3]
    %vm14 = vcmask 1041408
    %v15 = vsel %vm14, %v12, 0.0
    %v16 = vrot.slane %v15, 4
    %v17 = vadd.f32 %v15, %v16
    %v18 = vrot.slane %v17, 2
    %v19 = vadd.f32 %v17, %v18
    %v20 = vrot.slane %v19, 1
    %v21 = vadd.f32 %v19, %v20
    %v22 = vsel %vm14, %v13, 0.0
    %v23 = vrot.slane %v22, 4
    %v24 = vadd.f32 %v22, %v23
    %v25 = vrot.slane %v24, 2
    %v26 = vadd.f32 %v24, %v25
    %v27 = vrot.slane %v26, 1
    %v28 = vadd.f32 %v26, %v27
    %v29 = vmul.f32 %v21, 0.125
    %v30 = vmul.f32 %v28, 0.125
    %v31 = vld [vmem:[%s1] sm:$0xff]
    %v32 = vld [vmem:[%s1 + $0x8] sm:$0xff]
    %v33 = vld [vmem:[%s1 + $0x10] sm:$0xff]
    %v34 = vld [vmem:[%s1 + $0x18] sm:$0xff]
    %v35 = vld [vmem:[%s1 + $0x20] sm:$0xff]
    %v36 = vld [vmem:[%s1 + $0x28] sm:$0xff]
    %v37 = vld [vmem:[%s1 + $0x30] sm:$0xff]
    %v38 = vld [vmem:[%s1 + $0x38] sm:$0xff]
    %v39 = vld [vmem:[%s1 + $0x40] sm:$0xff]
    %v40 = vld [vmem:[%s1 + $0x48] sm:$0xff]
    %v41 = vld [vmem:[%s1 + $0x50] sm:$0xff]
    %v42 = vld [vmem:[%s1 + $0x58] sm:$0xff]
    %v43 = vld [vmem:[%s1 + $0x60] sm:$0xff]
    %v44 = vld [vmem:[%s1 + $0x68] sm:$0xff]
    %v45 = vld [vmem:[%s1 + $0x70] sm:$0xff]
    %v46 = vld [vmem:[%s1 + $0x78] sm:$0xff]
    %vm49 = vcmask 1041409
    %v50 = vsel %vm49, %v30, %v29
    %52 = vmatprep.subr.mxu0 0.0
    %53 = vmatpush1.msra.mxu0 %v46
    %54 = vmatprep.subr.mxu0 0.0
    %55 = vmatpush1.msra.mxu0 %v45
    %56 = vmatprep.subr.mxu0 0.0
    %57 = vmatpush1.msra.mxu0 %v44
    %58 = vmatprep.subr.mxu0 0.0
    %59 = vmatpush1.msra.mxu0 %v43
    %60 = vmatprep.subr.mxu0 0.0
    %61 = vmatpush1.msra.mxu0 %v42
    %62 = vmatprep.subr.mxu0 0.0
    %63 = vmatpush1.msra.mxu0 %v41
    %64 = vmatprep.subr.mxu0 0.0
    %65 = vmatpush1.msra.mxu0 %v40
    %66 = vmatprep.subr.mxu0 0.0
    %67 = vmatpush1.msra.mxu0 %v39
    %68 = vmatprep.subr.mxu0 0.0
    %69 = vmatpush1.msra.mxu0 %v38
    %70 = vmatprep.subr.mxu0 0.0
    %71 = vmatpush1.msra.mxu0 %v37
    %72 = vmatprep.subr.mxu0 0.0
    %73 = vmatpush1.msra.mxu0 %v36
    %74 = vmatprep.subr.mxu0 0.0
    %75 = vmatpush1.msra.mxu0 %v35
    %76 = vmatprep.subr.mxu0 0.0
    %77 = vmatpush1.msra.mxu0 %v34
    %78 = vmatprep.subr.mxu0 0.0
    %79 = vmatpush1.msra.mxu0 %v33
    %80 = vmatprep.subr.mxu0 0.0
    %81 = vmatpush1.msra.mxu0 %v32
    %82 = vmatprep.subr.mxu0 0.0
    %83 = vmatpush1.msra.mxu0 %v31
    %84 = vmatprep.subr.mxu0 0.0
    %85 = vmatpush2.msra.mxu0 0.0
    %86 = vmatprep.subr.mxu0 0.0
    %87 = vmatpush2.msra.mxu0 0.0
    %88 = vmatprep.subr.mxu0 0.0
    %89 = vmatpush2.msra.mxu0 0.0
    %90 = vmatprep.subr.mxu0 0.0
    %91 = vmatpush2.msra.mxu0 0.0
    %92 = vmatprep.subr.mxu0 0.0
    %93 = vmatpush2.msra.mxu0 0.0
    %94 = vmatprep.subr.mxu0 0.0
    %95 = vmatpush2.msra.mxu0 0.0
    %96 = vmatprep.subr.mxu0 0.0
    %97 = vmatpush2.msra.mxu0 0.0
    %98 = vmatprep.subr.mxu0 0.0
    %99 = vmatpush2.msra.mxu0 0.0
    %100 = vmatprep.subr.mxu0 0.0
    %101 = vmatpush2.msra.mxu0 0.0
    %102 = vmatprep.subr.mxu0 0.0
    %103 = vmatpush2.msra.mxu0 0.0
    %104 = vmatprep.subr.mxu0 0.0
    %105 = vmatpush2.msra.mxu0 0.0
    %106 = vmatprep.subr.mxu0 0.0
    %107 = vmatpush2.msra.mxu0 0.0
    %108 = vmatprep.subr.mxu0 0.0
    %109 = vmatpush2.msra.mxu0 0.0
    %110 = vmatprep.subr.mxu0 0.0
    %111 = vmatpush2.msra.mxu0 0.0
    %112 = vmatprep.subr.mxu0 0.0
    %113 = vmatpush2.msra.mxu0 0.0
    %114 = vmatprep.subr.mxu0 0.0
    %115 = vmatpush2.msra.mxu0 0.0
    %116 = vmatprep.mubr.f32.mxu0 0.0
    %117 = vmatmul.mubr.f32.gmra.mxu0 %v50
    %v118 = vpop.f32.mrf.mxu0
    %v119 = vadd.f32 0.0, %v118
    %v120 = vpop.f32.mrf.mxu0
    %121 = vdwg.mxu0
    %vm122 = vcmask 254976
    %123 = vst.msk [vmem:[#allocation2] sm:$0x3] %vm122, %v119
    // Predicated region
    $region10: #{tpu_custom_call.1} parent=1 // pred_check
      _
    $region11: #{tpu_custom_call.1} parent=1 // pred_check_branch
      %125 = sbr.rel (0) target = $region13
    $region12: #{tpu_custom_call.1} parent=1 // pred_region
      %s127 = ssub.s32 32, 32
      %128 = vsyncadd [#allocation3], %s127
      %s130 = sshll.u32 [#allocation2], 4
      %s131 = int_to_ptr.vmem [resolvable:$true] %s130
      %133 = dma.vmem_to_hbm [thread:$0]  %s131, 32, %s2, [#allocation3]
    $region13: #{tpu_custom_call.1} parent=1 // pred_fallthru
      _
    // Predicated region
    $region14: #{tpu_custom_call.1} parent=1 // pred_check
      _
    $region15: #{tpu_custom_call.1} parent=1 // pred_check_branch
      %135 = sbr.rel (0) target = $region17
    $region16: #{tpu_custom_call.1} parent=1 // pred_region
      %136 = dma.done [#allocation3], 32
    $region17: #{tpu_custom_call.1} parent=1 // pred_fallthru
      _
    %137 = vsyncpa [#allocation3], 1

</llo_original>
